<compile_context>
chip_gen: v7x
topology: tpu7x:2x2x1
jax: 0.10.0
libtpu: 0.0.40
codegen_flags: <defaults>
</compile_context>

<pallas_src>
import jax
import jax.numpy as jnp
from jax.experimental import pallas as pl
from jax.experimental.pallas import tpu as pltpu

_LANES = 128
_TARGET_BLOCK_BYTES = 4 * 1024 * 1024  # ~4 MiB block; 2 in + 2 out bufs = 16 MiB VMEM


def _gelu_tanh_kernel(x_ref, o_ref):
    # Load in native dtype, compute in f32, store back in native dtype.
    x = x_ref[...].astype(jnp.float32)
    c = jnp.float32(0.7978845608028654)  # sqrt(2/pi)
    x2 = x * x
    inner = c * x * (jnp.float32(1.0) + jnp.float32(0.044715) * x2)
    # tanh goes to the EUP slot; only a handful of VALU ops per element remain.
    out = x * (jnp.float32(0.5) + jnp.float32(0.5) * jnp.tanh(inner))
    o_ref[...] = out.astype(o_ref.dtype)


def _round_up(n, m):
    return ((n + m - 1) // m) * m


def _tiling(rows, itemsize):
    """Pick (tile_rows, grid) for a (rows, 128) slab of the given itemsize."""
    # dtype-aware sublane packing: 8 for f32, 16 for bf16, 32 for int8/fp8.
    packing = max(8, 8 * (4 // itemsize))
    if rows <= packing:
        # Full-array block (exempt from the (packing, 128) divisibility rule).
        return rows, 1
    # Max rows for a ~4 MiB block (keeps double-buffered VMEM well under 32 MiB).
    max_tile_rows = _round_up(_TARGET_BLOCK_BYTES // (_LANES * itemsize), packing)
    # Prefer >= 2 tiles so both v7x TensorCores get work on medium tensors.
    half = _round_up(pl.cdiv(rows, 2), packing)
    tile_rows = max(packing, min(max_tile_rows, half))
    return tile_rows, pl.cdiv(rows, tile_rows)


@jax.jit
def lambda_gelu_tanh(x):
    """Apply Lambda(fn=gelu_tanh) to an arbitrary-shape tensor via Pallas."""
    orig_shape = x.shape
    orig_dtype = x.dtype
    total = x.size
    itemsize = jnp.dtype(orig_dtype).itemsize

    rows = pl.cdiv(total, _LANES)
    padded_total = rows * _LANES

    xf = x.reshape(-1)
    if padded_total != total:
        # Slow path only when total is not lane-aligned; gelu(0) == 0 so zero
        # padding is harmless.  Fast path (common MAGMA shapes) is zero-copy.
        xf = jnp.pad(xf, (0, padded_total - total))
    x2d = xf.reshape(rows, _LANES)

    tile_rows, grid = _tiling(rows, itemsize)

    out2d = pl.pallas_call(
        _gelu_tanh_kernel,
        out_shape=jax.ShapeDtypeStruct((rows, _LANES), orig_dtype),
        grid=(grid,),
        in_specs=[pl.BlockSpec((tile_rows, _LANES), lambda i: (i, 0))],
        out_specs=pl.BlockSpec((tile_rows, _LANES), lambda i: (i, 0)),
        compiler_params=pltpu.CompilerParams(
            dimension_semantics=("parallel",),
            vmem_limit_bytes=32 * 1024 * 1024,
        ),
        cost_estimate=pl.CostEstimate(
            flops=10 * padded_total,
            transcendentals=padded_total,
            bytes_accessed=2 * padded_total * itemsize,
        ),
    )(x2d)

    out_flat = out2d.reshape(-1)
    if padded_total != total:
        out_flat = out_flat[:total]
    return out_flat.reshape(orig_shape)


def _reference_gelu_tanh(x):
    c = 0.7978845608028654
    xf = x.astype(jnp.float32)
    return (0.5 * xf * (1.0 + jnp.tanh(c * (xf + 0.044715 * xf ** 3)))).astype(
        x.dtype
    )


if __name__ == "__main__":
    key = jax.random.PRNGKey(0)

    # NCHW input, small shapes: batch=2, channels=4, spatial=16x16 (f32,
    # lane-aligned fast path).
    x = jax.random.normal(key, (2, 4, 16, 16), dtype=jnp.float32)
    out = jax.block_until_ready(lambda_gelu_tanh(x))
    ref = _reference_gelu_tanh(x)
    assert out.shape == x.shape and out.dtype == x.dtype
    assert jnp.allclose(out, ref, atol=1e-5, rtol=1e-5)

    # bf16, non-lane-aligned total (padded path + dtype-aware packing).
    xb = jax.random.normal(jax.random.PRNGKey(1), (3, 5, 7), dtype=jnp.bfloat16)
    outb = jax.block_until_ready(lambda_gelu_tanh(xb))
    refb = _reference_gelu_tanh(xb)
    assert outb.shape == xb.shape and outb.dtype == xb.dtype
    assert jnp.allclose(
        outb.astype(jnp.float32), refb.astype(jnp.float32), atol=1e-2, rtol=1e-2
    )

    print("KERNEL_OK")
</pallas_src>

<mosaic_0001>
module attributes {stable_mosaic.version = 11 : i64} {
  func.func @_gelu_tanh_kernel(%arg0: i32, %arg1: memref<8x128xf32, #tpu.memory_space<vmem>>, %arg2: memref<8x128xf32, #tpu.memory_space<vmem>>) attributes {dimension_semantics = [#tpu.dimension_semantics<parallel>], iteration_bounds = array<i64: 2>, scalar_prefetch = 0 : i64, scratch_operands = 0 : i64, tpu.core_type = #tpu.core_type<tc>, window_params = [{transform_indices = @transform_0, window_bounds = array<i64: 8, 128>}, {transform_indices = @transform_1, window_bounds = array<i64: 8, 128>}]} {
    %c0 = arith.constant 0 : index
    %c0_0 = arith.constant 0 : index
    %0 = vector.load %arg1[%c0, %c0_0] : memref<8x128xf32, #tpu.memory_space<vmem>>, vector<8x128xf32>
    %1 = arith.mulf %0, %0 : vector<8x128xf32>
    %cst = arith.constant 0.797884583 : f32
    %2 = vector.broadcast %cst : f32 to vector<8x128xf32>
    %3 = arith.mulf %2, %0 : vector<8x128xf32>
    %cst_1 = arith.constant 4.471500e-02 : f32
    %4 = vector.broadcast %cst_1 : f32 to vector<8x128xf32>
    %5 = arith.mulf %4, %1 : vector<8x128xf32>
    %cst_2 = arith.constant 1.000000e+00 : f32
    %6 = vector.broadcast %cst_2 : f32 to vector<8x128xf32>
    %7 = arith.addf %6, %5 : vector<8x128xf32>
    %8 = arith.mulf %3, %7 : vector<8x128xf32>
    %9 = math.tanh %8 : vector<8x128xf32>
    %cst_3 = arith.constant 5.000000e-01 : f32
    %10 = vector.broadcast %cst_3 : f32 to vector<8x128xf32>
    %11 = arith.mulf %10, %9 : vector<8x128xf32>
    %cst_4 = arith.constant 5.000000e-01 : f32
    %12 = vector.broadcast %cst_4 : f32 to vector<8x128xf32>
    %13 = arith.addf %12, %11 : vector<8x128xf32>
    %14 = arith.mulf %0, %13 : vector<8x128xf32>
    %c0_5 = arith.constant 0 : index
    %c0_6 = arith.constant 0 : index
    %15 = vector.load %arg2[%c0_5, %c0_6] : memref<8x128xf32, #tpu.memory_space<vmem>>, vector<8x128xf32>
    tpu.vector_store %arg2[%c0_5, %c0_6], %14 {strides = array<i32>} : memref<8x128xf32, #tpu.memory_space<vmem>>, vector<8x128xf32>,
    return
  }
  func.func @transform_0(%arg0: i32) -> (i32, i32) {
    %c0_i32 = arith.constant 0 : i32
    %c0_i32_0 = arith.constant 0 : i32
    return %arg0, %c0_i32 : i32, i32
  }
  func.func @transform_1(%arg0: i32) -> (i32, i32) {
    %c0_i32 = arith.constant 0 : i32
    %c0_i32_0 = arith.constant 0 : i32
    return %arg0, %c0_i32 : i32, i32
  }
}

</mosaic_0001>

<llo_original>
// kernel: lambda_gelu_tanh.1
$region0: #{lambda_gelu_tanh.1}
  #allocation0 [shape = 'u32[]', space=smem, size = 0x4, offset = 0x4, fixed_abs, tag = 'smem constant byte address 0x4 - core index']
  #allocation1 [shape = 'u32[144,128]{1,0:T(1,128)}', space=vmem, size = 0x12000, scoped, tag = 'internal scratch']
  %s0 = inlined_call_operand.vmem [shape: f32[16,128], index: 0, kind: input, shape index: {}]
  %s1 = inlined_call_operand.vmem [shape: f32[16,128], index: 1, kind: output, shape index: {}]
  %s2 = sld [smem:[#allocation0]]
  $region37: #{lambda_gelu_tanh.1} parent=0
    _
  %s4 = ssub.s32 1, %s2
  %s5 = scalar_select 0, %s4, %s2
  loop: start=0, step=1, limit=4
  $region2: #{lambda_gelu_tanh.1} parent=0 // loop_pre_header
    _
  $region3: #{lambda_gelu_tanh.1} parent=0 // loop_header
    %s7 = sphi 0, %s11
    %p8 = scmp.ge.s32.totalorder %s7, 4
    %s17 = sphi 0, %s19
    %s20 = sphi 0, %s17
    %s21 = sphi 0, %s20
    %s37 = sphi 0, %s21
    %s43 = sphi 0, %s45
    %s46 = sphi 0, %s43
    %s47 = sphi 0, %s46
    %s63 = sphi 0, %s47
  $region4: #{lambda_gelu_tanh.1} parent=0 // loop_header_branch
    %10 = sbr.rel (%p8) target = $region8
  $region5: #{lambda_gelu_tanh.1} parent=0 // loop_body
    %s12 = ssub.s32 %s7, 1
    %s13 = ssub.s32 %s7, 2
    %s14 = sadd.s32 %s7, 1
    %s15 = ssub.s32 %s7, %s14
    %p16 = scmp.eq.s32.totalorder %s15, 0
    %s18 = sadd.s32 %s17, 1
    %s19 = scalar_select %p16, %s17, %s18
    %p22 = pneg %p16
    %p23 = scmp.eq.s32.totalorder %s7, 1
    %p24 = por %p22, %p23
    %p25 = scmp.ne.s32.totalorder %s17, %s20
    %p26 = scmp.eq.s32.totalorder %s7, 0
    %p27 = por %p25, %p26
    %p28 = scmp.ne.s32.totalorder %s17, %s20
    %p29 = scmp.eq.s32.totalorder %s12, 1
    %p30 = por %p28, %p29
    %p31 = scmp.ne.s32.totalorder %s20, %s21
    %p32 = scmp.eq.s32.totalorder %s12, 0
    %p33 = por %p31, %p32
    %p34 = scmp.ne.s32.totalorder %s20, %s21
    %p35 = scmp.eq.s32.totalorder %s13, 1
    %p36 = por %p34, %p35
    %p38 = scmp.ne.s32.totalorder %s21, %s37
    %p39 = scmp.eq.s32.totalorder %s13, 0
    %p40 = por %p38, %p39
    %s41 = ssub.s32 %s7, %s14
    %p42 = scmp.eq.s32.totalorder %s41, 0
    %s44 = sadd.s32 %s43, 1
    %s45 = scalar_select %p42, %s43, %s44
    %p48 = pneg %p42
    %p49 = scmp.eq.s32.totalorder %s7, 1
    %p50 = por %p48, %p49
    %p51 = scmp.ne.s32.totalorder %s43, %s46
    %p52 = scmp.eq.s32.totalorder %s7, 0
    %p53 = por %p51, %p52
    %p54 = scmp.ne.s32.totalorder %s43, %s46
    %p55 = scmp.eq.s32.totalorder %s12, 1
    %p56 = por %p54, %p55
    %p57 = scmp.ne.s32.totalorder %s46, %s47
    %p58 = scmp.eq.s32.totalorder %s12, 0
    %p59 = por %p57, %p58
    %p60 = scmp.ne.s32.totalorder %s46, %s47
    %p61 = scmp.eq.s32.totalorder %s13, 1
    %p62 = por %p60, %p61
    %p64 = scmp.ne.s32.totalorder %s47, %s63
    %p65 = scmp.eq.s32.totalorder %s13, 0
    %p66 = por %p64, %p65
    %p67 = scmp.le.s32.totalorder 1, %s7
    %p68 = scmp.lt.s32.totalorder %s7, 3
    %p69 = pnand %p67, %p68
    %p70 = pneg %p69
    // Predicated region
    $region9: #{lambda_gelu_tanh.1} parent=5 // pred_check
      _
    $region10: #{lambda_gelu_tanh.1} parent=5 // pred_check_branch
      %72 = sbr.rel (%p69) target = $region12
    $region11: #{lambda_gelu_tanh.1} parent=5 // pred_region
      %s73 = ssub.s32 %s7, 1
    $region12: #{lambda_gelu_tanh.1} parent=5 // pred_fallthru
      _
    %p74 = scmp.lt.s32.totalorder %s7, 2
    // Predicated region
    $region13: #{lambda_gelu_tanh.1} parent=5 // pred_check
      %p75 = pneg %p74
    $region14: #{lambda_gelu_tanh.1} parent=5 // pred_check_branch
      %77 = sbr.rel (%p75) target = $region16
    $region15: #{lambda_gelu_tanh.1} parent=5 // pred_region
      // Predicated region
      $region17: #{lambda_gelu_tanh.1} parent=15 // pred_check
        %p78 = pneg %p27
      $region18: #{lambda_gelu_tanh.1} parent=15 // pred_check_branch
        %80 = sbr.rel (%p78) target = $region20
      $region19: #{lambda_gelu_tanh.1} parent=15 // pred_region
        %p81 = scmp.lt.s32.totalorder %s7, 1
        %s82 = scalar_select %p81, %s7, 1
        %s83 = smul.addr %s82, 8
        %s84 = scalar_lea.vmem %s0, %s83
      $region20: #{lambda_gelu_tanh.1} parent=15 // pred_fallthru
        _
    $region16: #{lambda_gelu_tanh.1} parent=5 // pred_fallthru
      _
    %p85 = scmp.le.s32.totalorder 1, %s7
    %p86 = scmp.lt.s32.totalorder %s7, 3
    %p87 = pnand %p85, %p86
    %p88 = pneg %p87
    // Predicated region
    $region21: #{lambda_gelu_tanh.1} parent=5 // pred_check
      _
    $region22: #{lambda_gelu_tanh.1} parent=5 // pred_check_branch
      %90 = sbr.rel (%p87) target = $region24
    $region23: #{lambda_gelu_tanh.1} parent=5 // pred_region
      %s91 = ssub.s32 %s7, 1
      %p92 = scmp.lt.s32.totalorder %s12, 1
      %s93 = scalar_select %p92, %s12, 1
      %s94 = smul.addr %s93, 8
      %s95 = scalar_lea.vmem %s0, %s94
      %p96 = pneg %p33
      %p97 = pneg %p30
      %p98 = pneg %p59
      %p99 = pneg %p56
      %p100 = scmp.lt.s32.totalorder %s12, 1
      %s101 = scalar_select %p100, %s12, 1
      %s102 = smul.addr %s101, 8
      %s103 = scalar_lea.vmem %s1, %s102
      %p104 = scmp.lt.s32.totalorder %s12, 1
      %s105 = scalar_select %p104, %s12, 1
      %s106 = smul.addr %s105, 8
      %s107 = scalar_lea.vmem %s0, %s106
      %p108 = scmp.lt.s32.totalorder %s12, 1
      %s109 = scalar_select %p108, %s12, 1
      %s110 = smul.addr %s109, 8
      %s111 = scalar_lea.vmem %s1, %s110
      %v112 = vld [vmem:[%s107] sm:$0xff]
      %v113 = vmul.f32 %v112, %v112
      %v114 = vmul.f32 %v112, 0.7978846
      %v115 = vmul.f32 %v113, 0.044715
      %v116 = vadd.f32 %v115, 1.0
      %v117 = vmul.f32 %v114, %v116
      %v118 = vtanh.pop %v117
      %v119 = vmul.f32 %v118, 0.5
      %v120 = vadd.f32 %v119, 0.5
      %v121 = vmul.f32 %v112, %v120
      %122 = vst [vmem:[%s111] sm:$0xff] %v121
      %p123 = scmp.lt.s32.totalorder %s12, 1
      %s124 = scalar_select %p123, %s12, 1
      %s125 = smul.addr %s124, 8
      %s126 = scalar_lea.vmem %s1, %s125
      // Predicated region
      $region25: #{lambda_gelu_tanh.1} parent=23 // pred_check
        %p127 = pneg %p56
      $region26: #{lambda_gelu_tanh.1} parent=23 // pred_check_branch
        %129 = sbr.rel (%p127) target = $region28
      $region27: #{lambda_gelu_tanh.1} parent=23 // pred_region
        _
      $region28: #{lambda_gelu_tanh.1} parent=23 // pred_fallthru
        _
    $region24: #{lambda_gelu_tanh.1} parent=5 // pred_fallthru
      _
    %p130 = scmp.le.s32.totalorder 2, %s7
    // Predicated region
    $region29: #{lambda_gelu_tanh.1} parent=5 // pred_check
      %p131 = pneg %p130
    $region30: #{lambda_gelu_tanh.1} parent=5 // pred_check_branch
      %133 = sbr.rel (%p131) target = $region32
    $region31: #{lambda_gelu_tanh.1} parent=5 // pred_region
      %s134 = ssub.s32 %s7, 2
      // Predicated region
      $region33: #{lambda_gelu_tanh.1} parent=31 // pred_check
        %p135 = pneg %p62
      $region34: #{lambda_gelu_tanh.1} parent=31 // pred_check_branch
        %137 = sbr.rel (%p135) target = $region36
      $region35: #{lambda_gelu_tanh.1} parent=31 // pred_region
        %p138 = scmp.lt.s32.totalorder %s13, 1
        %s139 = scalar_select %p138, %s13, 1
        %s140 = smul.addr %s139, 8
        %s141 = scalar_lea.vmem %s1, %s140
      $region36: #{lambda_gelu_tanh.1} parent=31 // pred_fallthru
        _
    $region32: #{lambda_gelu_tanh.1} parent=5 // pred_fallthru
      _
  $region6: #{lambda_gelu_tanh.1} parent=0 // loop_footer
    %s11 = sadd.s32 1, %s7
  $region7: #{lambda_gelu_tanh.1} parent=0 // loop_footer_branch
    %6 = sbr.rel target = $region3
  $region8: #{lambda_gelu_tanh.1} parent=0 // loop_exit
    _

</llo_original>
